<compile_context>
chip_gen: v7x
topology: tpu7x:2x2x1
jax: 0.10.0
libtpu: 0.0.40
codegen_flags: <defaults>
</compile_context>

<pallas_src>
import jax
import jax.numpy as jnp
from jax.experimental import pallas as pl
from jax.experimental.pallas import tpu as pltpu

D_IN, D_H1, D_H2, D_H3, D_OUT = 180, 128, 64, 128, 180


def _round_up(n, m):
    return ((n + m - 1) // m) * m


def mlp_kernel(x_ref, w1_ref, b1_ref, w23_ref, b23_ref, w4_ref, b4_ref, o_ref):
    # Cast the f32 input tile to bf16 on the VPU (no extra HBM pass in the wrapper).
    x = x_ref[...].astype(jnp.bfloat16)

    # fc1 + ReLU  (bf16 operands, f32 accumulation on the MXU).
    h = jnp.dot(x, w1_ref[...], preferred_element_type=jnp.float32)
    h = jnp.maximum(h + b1_ref[...], 0.0)

    # fc2 and fc3 folded into one 128x128 layer (valid: Net.forward has no
    # activation between fc2 and fc3); ReLU afterwards.
    h = jnp.dot(h.astype(jnp.bfloat16), w23_ref[...],
                preferred_element_type=jnp.float32)
    h = jnp.maximum(h + b23_ref[...], 0.0)

    # fc4 (no activation); f32 output at the true 180-lane width.
    h = jnp.dot(h.astype(jnp.bfloat16), w4_ref[...],
                preferred_element_type=jnp.float32)
    o_ref[...] = (h + b4_ref[...]).astype(o_ref.dtype)


def prepare_params(params):
    """One-time parameter prep (hoisted out of the per-call path):
    fold fc2@fc3, fold biases, cast weights to bf16, keep biases f32."""
    w23 = params["w2"] @ params["w3"]                  # (128, 128), f32 fold
    b23 = params["b2"] @ params["w3"] + params["b3"]   # (1, 128)
    return {
        "w1": params["w1"].astype(jnp.bfloat16),
        "b1": params["b1"].astype(jnp.float32),
        "w23": w23.astype(jnp.bfloat16),
        "b23": b23.astype(jnp.float32),
        "w4": params["w4"].astype(jnp.bfloat16),
        "b4": params["b4"].astype(jnp.float32),
    }


def mlp_forward(x, prepped, *, tm=1024):
    """x: (B, 180) float32; prepped: output of prepare_params()."""
    B = x.shape[0]

    # Large batch tiles, no batch padding (Pallas masks the ragged last block;
    # all math is row-wise so padded rows cannot affect valid rows).
    tm_eff = min(tm, _round_up(B, 8))
    if B >= 16:
        # Ensure at least 2 grid steps so the "parallel" axis shards across
        # both TensorCores on v7x.
        tm_eff = min(tm_eff, _round_up(-(-B // 2), 8))
    grid = (pl.cdiv(B, tm_eff),)

    def full_spec(shape):
        # Whole array as one block, constant across the batch grid.
        return pl.BlockSpec(shape, lambda i: (0, 0))

    in_specs = [
        pl.BlockSpec((tm_eff, D_IN), lambda i: (i, 0)),   # x tile (f32)
        full_spec((D_IN, D_H1)), full_spec((1, D_H1)),    # w1 (bf16), b1 (f32)
        full_spec((D_H1, D_H3)), full_spec((1, D_H3)),    # w23 (bf16), b23 (f32)
        full_spec((D_H3, D_OUT)), full_spec((1, D_OUT)),  # w4 (bf16), b4 (f32)
    ]
    out_specs = pl.BlockSpec((tm_eff, D_OUT), lambda i: (i, 0))

    flops = 2 * B * (D_IN * D_H1 + D_H1 * D_H3 + D_H3 * D_OUT)
    bytes_accessed = (
        B * D_IN * 4                                                   # x (f32 in)
        + (D_IN * D_H1 + D_H1 * D_H3 + D_H3 * D_OUT) * 2               # bf16 weights
        + (D_H1 + D_H3 + D_OUT) * 4                                    # f32 biases
        + B * D_OUT * 4                                                # f32 out
    )

    return pl.pallas_call(
        mlp_kernel,
        out_shape=jax.ShapeDtypeStruct((B, D_OUT), jnp.float32),
        grid_spec=pltpu.PrefetchScalarGridSpec(
            num_scalar_prefetch=0,
            grid=grid,
            in_specs=in_specs,
            out_specs=out_specs,
        ),
        compiler_params=pltpu.CompilerParams(
            dimension_semantics=("parallel",)),
        cost_estimate=pl.CostEstimate(
            flops=flops, transcendentals=0, bytes_accessed=bytes_accessed),
    )(x, prepped["w1"], prepped["b1"], prepped["w23"], prepped["b23"],
      prepped["w4"], prepped["b4"])


def init_params(key):
    """Deterministic init matching the nn.Linear shapes (stored transposed)."""
    ks = jax.random.split(key, 8)
    dims = [(D_IN, D_H1), (D_H1, D_H2), (D_H2, D_H3), (D_H3, D_OUT)]
    params = {}
    for idx, (din, dout) in enumerate(dims, start=1):
        bound = 1.0 / jnp.sqrt(din)  # PyTorch default uniform(-1/sqrt(in), 1/sqrt(in))
        params[f"w{idx}"] = jax.random.uniform(
            ks[2 * (idx - 1)], (din, dout), jnp.float32, -bound, bound)
        params[f"b{idx}"] = jax.random.uniform(
            ks[2 * (idx - 1) + 1], (1, dout), jnp.float32, -bound, bound)
    return params


def mlp_reference(x, p):
    """Pure f32 reference of the original (un-folded) forward pass."""
    h = jnp.maximum(x @ p["w1"] + p["b1"], 0.0)
    h = h @ p["w2"] + p["b2"]
    h = jnp.maximum(h @ p["w3"] + p["b3"], 0.0)
    return h @ p["w4"] + p["b4"]


if __name__ == "__main__":
    key = jax.random.PRNGKey(0)
    k_param, k_x = jax.random.split(key)

    params = init_params(k_param)
    prepped = prepare_params(params)

    B = 8
    x = jax.random.normal(k_x, (B, D_IN), dtype=jnp.float32)

    out = mlp_forward(x, prepped)
    out = jax.block_until_ready(out)

    ref = mlp_reference(x, params)
    assert out.shape == (B, D_OUT)
    # bf16 matmul operands + fc2/fc3 fold => compare at bf16-level tolerance.
    assert jnp.allclose(out, ref, atol=5e-2, rtol=5e-2), (
        float(jnp.max(jnp.abs(out - ref))))

    print("KERNEL_OK")
</pallas_src>

<mosaic_0001>
module attributes {stable_mosaic.version = 11 : i64} {
  func.func @mlp_kernel(%arg0: i32, %arg1: memref<8x180xf32, #tpu.memory_space<vmem>>, %arg2: memref<180x128xbf16, #tpu.memory_space<vmem>>, %arg3: memref<1x128xf32, #tpu.memory_space<vmem>>, %arg4: memref<128x128xbf16, #tpu.memory_space<vmem>>, %arg5: memref<1x128xf32, #tpu.memory_space<vmem>>, %arg6: memref<128x180xbf16, #tpu.memory_space<vmem>>, %arg7: memref<1x180xf32, #tpu.memory_space<vmem>>, %arg8: memref<8x180xf32, #tpu.memory_space<vmem>>) attributes {dimension_semantics = [#tpu.dimension_semantics<parallel>], iteration_bounds = array<i64: 1>, scalar_prefetch = 0 : i64, scratch_operands = 0 : i64, tpu.core_type = #tpu.core_type<tc>, window_params = [{transform_indices = @transform_0, window_bounds = array<i64: 8, 180>}, {pipeline_mode = #tpu.pipeline_mode<synchronous>, transform_indices = @transform_1, window_bounds = array<i64: 180, 128>}, {pipeline_mode = #tpu.pipeline_mode<synchronous>, transform_indices = @transform_2, window_bounds = array<i64: 1, 128>}, {pipeline_mode = #tpu.pipeline_mode<synchronous>, transform_indices = @transform_3, window_bounds = array<i64: 128, 128>}, {pipeline_mode = #tpu.pipeline_mode<synchronous>, transform_indices = @transform_4, window_bounds = array<i64: 1, 128>}, {pipeline_mode = #tpu.pipeline_mode<synchronous>, transform_indices = @transform_5, window_bounds = array<i64: 128, 180>}, {pipeline_mode = #tpu.pipeline_mode<synchronous>, transform_indices = @transform_6, window_bounds = array<i64: 1, 180>}, {transform_indices = @transform_7, window_bounds = array<i64: 8, 180>}]} {
    %c0 = arith.constant 0 : index
    %c0_0 = arith.constant 0 : index
    %0 = vector.load %arg1[%c0, %c0_0] : memref<8x180xf32, #tpu.memory_space<vmem>>, vector<8x180xf32>
    %1 = arith.truncf %0 : vector<8x180xf32> to vector<8x180xbf16>
    %c0_1 = arith.constant 0 : index
    %c0_2 = arith.constant 0 : index
    %2 = vector.load %arg2[%c0_1, %c0_2] : memref<180x128xbf16, #tpu.memory_space<vmem>>, vector<180x128xbf16>
    %cst = arith.constant dense<0.000000e+00> : vector<8x128xf32>
    %3 = tpu.matmul %1, %2, %cst {dimension_numbers = #tpu.dot_dimension_numbers<[1], [0], [0], [1], [0, 0, 1, 1], [], []>} : vector<8x180xbf16>, vector<180x128xbf16>, vector<8x128xf32> -> vector<8x128xf32>
    %c0_3 = arith.constant 0 : index
    %c0_4 = arith.constant 0 : index
    %4 = vector.load %arg3[%c0_3, %c0_4] : memref<1x128xf32, #tpu.memory_space<vmem>>, vector<1x128xf32>
    %5 = vector.broadcast %4 : vector<1x128xf32> to vector<8x128xf32>
    %6 = arith.addf %3, %5 : vector<8x128xf32>
    %cst_5 = arith.constant 0.000000e+00 : f32
    %7 = vector.broadcast %cst_5 : f32 to vector<8x128xf32>
    %8 = arith.maximumf %6, %7 : vector<8x128xf32>
    %9 = arith.truncf %8 : vector<8x128xf32> to vector<8x128xbf16>
    %c0_6 = arith.constant 0 : index
    %c0_7 = arith.constant 0 : index
    %10 = vector.load %arg4[%c0_6, %c0_7] : memref<128x128xbf16, #tpu.memory_space<vmem>>, vector<128x128xbf16>
    %cst_8 = arith.constant dense<0.000000e+00> : vector<8x128xf32>
    %11 = tpu.matmul %9, %10, %cst_8 {dimension_numbers = #tpu.dot_dimension_numbers<[1], [0], [0], [1], [0, 0, 1, 1], [], []>} : vector<8x128xbf16>, vector<128x128xbf16>, vector<8x128xf32> -> vector<8x128xf32>
    %c0_9 = arith.constant 0 : index
    %c0_10 = arith.constant 0 : index
    %12 = vector.load %arg5[%c0_9, %c0_10] : memref<1x128xf32, #tpu.memory_space<vmem>>, vector<1x128xf32>
    %13 = vector.broadcast %12 : vector<1x128xf32> to vector<8x128xf32>
    %14 = arith.addf %11, %13 : vector<8x128xf32>
    %cst_11 = arith.constant 0.000000e+00 : f32
    %15 = vector.broadcast %cst_11 : f32 to vector<8x128xf32>
    %16 = arith.maximumf %14, %15 : vector<8x128xf32>
    %17 = arith.truncf %16 : vector<8x128xf32> to vector<8x128xbf16>
    %c0_12 = arith.constant 0 : index
    %c0_13 = arith.constant 0 : index
    %18 = vector.load %arg6[%c0_12, %c0_13] : memref<128x180xbf16, #tpu.memory_space<vmem>>, vector<128x180xbf16>
    %cst_14 = arith.constant dense<0.000000e+00> : vector<8x180xf32>
    %19 = tpu.matmul %17, %18, %cst_14 {dimension_numbers = #tpu.dot_dimension_numbers<[1], [0], [0], [1], [0, 0, 1, 1], [], []>} : vector<8x128xbf16>, vector<128x180xbf16>, vector<8x180xf32> -> vector<8x180xf32>
    %c0_15 = arith.constant 0 : index
    %c0_16 = arith.constant 0 : index
    %20 = vector.load %arg7[%c0_15, %c0_16] : memref<1x180xf32, #tpu.memory_space<vmem>>, vector<1x180xf32>
    %21 = vector.broadcast %20 : vector<1x180xf32> to vector<8x180xf32>
    %22 = arith.addf %19, %21 : vector<8x180xf32>
    %c0_17 = arith.constant 0 : index
    %c0_18 = arith.constant 0 : index
    %23 = vector.load %arg8[%c0_17, %c0_18] : memref<8x180xf32, #tpu.memory_space<vmem>>, vector<8x180xf32>
    tpu.vector_store %arg8[%c0_17, %c0_18], %22 {strides = array<i32>} : memref<8x180xf32, #tpu.memory_space<vmem>>, vector<8x180xf32>,
    return
  }
  func.func @transform_0(%arg0: i32) -> (i32, i32) {
    %c0_i32 = arith.constant 0 : i32
    %c0_i32_0 = arith.constant 0 : i32
    return %arg0, %c0_i32 : i32, i32
  }
  func.func @transform_1(%arg0: i32) -> (i32, i32) {
    %c0_i32 = arith.constant 0 : i32
    %c0_i32_0 = arith.constant 0 : i32
    %c0_i32_1 = arith.constant 0 : i32
    return %c0_i32, %c0_i32_0 : i32, i32
  }
  func.func @transform_2(%arg0: i32) -> (i32, i32) {
    %c0_i32 = arith.constant 0 : i32
    %c0_i32_0 = arith.constant 0 : i32
    %c0_i32_1 = arith.constant 0 : i32
    return %c0_i32, %c0_i32_0 : i32, i32
  }
  func.func @transform_3(%arg0: i32) -> (i32, i32) {
    %c0_i32 = arith.constant 0 : i32
    %c0_i32_0 = arith.constant 0 : i32
    %c0_i32_1 = arith.constant 0 : i32
    return %c0_i32, %c0_i32_0 : i32, i32
  }
  func.func @transform_4(%arg0: i32) -> (i32, i32) {
    %c0_i32 = arith.constant 0 : i32
    %c0_i32_0 = arith.constant 0 : i32
    %c0_i32_1 = arith.constant 0 : i32
    return %c0_i32, %c0_i32_0 : i32, i32
  }
  func.func @transform_5(%arg0: i32) -> (i32, i32) {
    %c0_i32 = arith.constant 0 : i32
    %c0_i32_0 = arith.constant 0 : i32
    %c0_i32_1 = arith.constant 0 : i32
    return %c0_i32, %c0_i32_0 : i32, i32
  }
  func.func @transform_6(%arg0: i32) -> (i32, i32) {
    %c0_i32 = arith.constant 0 : i32
    %c0_i32_0 = arith.constant 0 : i32
    %c0_i32_1 = arith.constant 0 : i32
    return %c0_i32, %c0_i32_0 : i32, i32
  }
  func.func @transform_7(%arg0: i32) -> (i32, i32) {
    %c0_i32 = arith.constant 0 : i32
    %c0_i32_0 = arith.constant 0 : i32
    return %arg0, %c0_i32 : i32, i32
  }
}

</mosaic_0001>

<llo_original>
// kernel: tpu_custom_call.1
$region0: #{tpu_custom_call.1}
  #allocation0 [shape = 'u32[]', space=smem, size = 0x4, offset = 0x4, fixed_abs, tag = 'smem constant byte address 0x4 - core index']
  #allocation1 [shape = 'u32[144,128]{1,0:T(1,128)}', space=vmem, size = 0x12000, scoped, tag = 'internal scratch']
  %s0 = inlined_call_operand.vmem [shape: f32[8,180], index: 0, kind: input, shape index: {}]
  %s1 = inlined_call_operand.vmem [shape: bf16[180,128], index: 1, kind: input, shape index: {}]
  %s2 = inlined_call_operand.vmem [shape: f32[1,128], index: 2, kind: input, shape index: {}]
  %s3 = inlined_call_operand.vmem [shape: bf16[128,128], index: 3, kind: input, shape index: {}]
  %s4 = inlined_call_operand.vmem [shape: f32[1,128], index: 4, kind: input, shape index: {}]
  %s5 = inlined_call_operand.vmem [shape: bf16[128,180], index: 5, kind: input, shape index: {}]
  %s6 = inlined_call_operand.vmem [shape: f32[1,180], index: 6, kind: input, shape index: {}]
  %s7 = inlined_call_operand.hbm [shape: f32[8,180], index: 7, kind: output, shape index: {}]
  %s8 = sld [smem:[#allocation0]]
  $region38: #{tpu_custom_call.1} parent=0
    _
  %s10 = ssub.s32 1, %s8
  %s11 = scalar_select 0, %s10, %s8
  $region1: #{tpu_custom_call.1} parent=0
    #allocation2 [shape = 'u8[8192]{0}', space=vmem, size = 0x2000, scoped, tag = 'output window, operand 0, single buffered']
    #allocation3 [shape = 's32[1]{0}', space=sflag, size = 0x4, scoped, tag = 'scoped memory for tpu_custom_call.1']
    %12 = vsyncpa [#allocation3], 0
    // Predicated region
    $region2: #{tpu_custom_call.1} parent=1 // pred_check
      _
    $region3: #{tpu_custom_call.1} parent=1 // pred_check_branch
      %14 = sbr.rel (0) target = $region5
    $region4: #{tpu_custom_call.1} parent=1 // pred_region
      _
    $region5: #{tpu_custom_call.1} parent=1 // pred_fallthru
      _
    // Predicated region
    $region6: #{tpu_custom_call.1} parent=1 // pred_check
      _
    $region7: #{tpu_custom_call.1} parent=1 // pred_check_branch
      %16 = sbr.rel (0) target = $region9
    $region8: #{tpu_custom_call.1} parent=1 // pred_region
      _
    $region9: #{tpu_custom_call.1} parent=1 // pred_fallthru
      _
    // Predicated region
    $region10: #{tpu_custom_call.1} parent=1 // pred_check
      _
    $region11: #{tpu_custom_call.1} parent=1 // pred_check_branch
      %18 = sbr.rel (0) target = $region13
    $region12: #{tpu_custom_call.1} parent=1 // pred_region
      _
    $region13: #{tpu_custom_call.1} parent=1 // pred_fallthru
      _
    // Predicated region
    $region14: #{tpu_custom_call.1} parent=1 // pred_check
      _
    $region15: #{tpu_custom_call.1} parent=1 // pred_check_branch
      %20 = sbr.rel (0) target = $region17
    $region16: #{tpu_custom_call.1} parent=1 // pred_region
      _
    $region17: #{tpu_custom_call.1} parent=1 // pred_fallthru
      _
    // Predicated region
    $region18: #{tpu_custom_call.1} parent=1 // pred_check
      _
    $region19: #{tpu_custom_call.1} parent=1 // pred_check_branch
      %22 = sbr.rel (0) target = $region21
    $region20: #{tpu_custom_call.1} parent=1 // pred_region
      _
    $region21: #{tpu_custom_call.1} parent=1 // pred_fallthru
      _
    // Predicated region
    $region22: #{tpu_custom_call.1} parent=1 // pred_check
      _
    $region23: #{tpu_custom_call.1} parent=1 // pred_check_branch
      %24 = sbr.rel (0) target = $region25
    $region24: #{tpu_custom_call.1} parent=1 // pred_region
      _
    $region25: #{tpu_custom_call.1} parent=1 // pred_fallthru
      _
    // Predicated region
    $region26: #{tpu_custom_call.1} parent=1 // pred_check
      _
    $region27: #{tpu_custom_call.1} parent=1 // pred_check_branch
      %26 = sbr.rel (0) target = $region29
    $region28: #{tpu_custom_call.1} parent=1 // pred_region
      _
    $region29: #{tpu_custom_call.1} parent=1 // pred_fallthru
      _
    %v28 = vld [vmem:[%s0] sm:$0xff]
    %v29 = vld [vmem:[%s0 + $0x8] sm:$0xff]
    %v30 = vpack.c.bf16 %v28, %v28
    %v31 = vpack.c.bf16 %v29, %v29
    %v32 = vld [vmem:[%s1] sm:$0xf]
    %v33 = vld [vmem:[%s1 + $0x4] sm:$0xf]
    %v34 = vld [vmem:[%s1 + $0x8] sm:$0xf]
    %v35 = vld [vmem:[%s1 + $0xc] sm:$0xf]
    %v36 = vld [vmem:[%s1 + $0x10] sm:$0xf]
    %v37 = vld [vmem:[%s1 + $0x14] sm:$0xf]
    %v38 = vld [vmem:[%s1 + $0x18] sm:$0xf]
    %v39 = vld [vmem:[%s1 + $0x1c] sm:$0xf]
    %v40 = vld [vmem:[%s1 + $0x20] sm:$0xf]
    %v41 = vld [vmem:[%s1 + $0x24] sm:$0xf]
    %v42 = vld [vmem:[%s1 + $0x28] sm:$0xf]
    %v43 = vld [vmem:[%s1 + $0x2c] sm:$0xf]
    %v44 = vld [vmem:[%s1 + $0x30] sm:$0xf]
    %v45 = vld [vmem:[%s1 + $0x34] sm:$0xf]
    %v46 = vld [vmem:[%s1 + $0x38] sm:$0xf]
    %v47 = vld [vmem:[%s1 + $0x3c] sm:$0xf]
    %v48 = vld [vmem:[%s1 + $0x40] sm:$0xf]
    %v49 = vld [vmem:[%s1 + $0x44] sm:$0xf]
    %v50 = vld [vmem:[%s1 + $0x48] sm:$0xf]
    %v51 = vld [vmem:[%s1 + $0x4c] sm:$0xf]
    %v52 = vld [vmem:[%s1 + $0x50] sm:$0xf]
    %v53 = vld [vmem:[%s1 + $0x54] sm:$0xf]
    %v54 = vld [vmem:[%s1 + $0x58] sm:$0x3]
    %v55 = vld [vmem:[%s2] sm:$0x1]
    %v57 = vlaneseq
    %v58 = vshrl.u32 %v57, 7
    %v59 = vsub.s32 0, %v58
    %v60 = vrot.slane %v55, %v59
    %v85 = vunpack.c.l.b16 %v32
    %v86 = vunpack.c.l.b16 %v33
    %v87 = vunpack.c.l.b16 %v34
    %v88 = vunpack.c.l.b16 %v35
    %v89 = vunpack.c.l.b16 %v36
    %v90 = vunpack.c.l.b16 %v37
    %v91 = vunpack.c.l.b16 %v38
    %v92 = vunpack.c.l.b16 %v39
    %v93 = vunpack.c.l.b16 %v40
    %v94 = vunpack.c.l.b16 %v41
    %v95 = vunpack.c.l.b16 %v42
    %v96 = vunpack.c.l.b16 %v43
    %v97 = vunpack.c.l.b16 %v44
    %v98 = vunpack.c.l.b16 %v45
    %v99 = vunpack.c.l.b16 %v46
    %v100 = vunpack.c.l.b16 %v47
    %v101 = vunpack.c.l.b16 %v48
    %v102 = vunpack.c.l.b16 %v49
    %v103 = vunpack.c.l.b16 %v50
    %v104 = vunpack.c.l.b16 %v51
    %v105 = vunpack.c.l.b16 %v52
    %v106 = vunpack.c.l.b16 %v53
    %v107 = vunpack.c.l.b16 %v54
    %v108 = vpack.c.b16 %v86, %v85
    %v109 = vpack.c.b16 %v88, %v87
    %v110 = vpack.c.b16 %v90, %v89
    %v111 = vpack.c.b16 %v92, %v91
    %v112 = vpack.c.b16 %v94, %v93
    %v113 = vpack.c.b16 %v96, %v95
    %v114 = vpack.c.b16 %v98, %v97
    %v115 = vpack.c.b16 %v100, %v99
    %v116 = vpack.c.b16 %v102, %v101
    %v117 = vpack.c.b16 %v104, %v103
    %v118 = vpack.c.b16 %v106, %v105
    %v119 = vpack.c.b16 %v107, %v107
    %vm131 = vcmask 424960
    %v133 = vsel %vm131, %v31, 0
    %vm135 = vcmask 1041408
    %v137 = vsel %vm135, %v119, 0
    %139 = vmatprep.subr.bf16.mxu0 0
    %140 = vmatpush1.bf16.msra.mxu0 %v108
    %141 = vmatprep.subr.bf16.mxu0 0
    %142 = vmatpush1.bf16.msra.mxu0 %v109
    %143 = vmatprep.subr.bf16.mxu0 0
    %144 = vmatpush1.bf16.msra.mxu0 %v110
    %145 = vmatprep.subr.bf16.mxu0 0
    %146 = vmatpush1.bf16.msra.mxu0 %v111
    %147 = vmatprep.subr.bf16.mxu0 0
    %148 = vmatpush1.bf16.msra.mxu0 %v112
    %149 = vmatprep.subr.bf16.mxu0 0
    %150 = vmatpush1.bf16.msra.mxu0 %v113
    %151 = vmatprep.subr.bf16.mxu0 0
    %152 = vmatpush1.bf16.msra.mxu0 %v114
    %153 = vmatprep.subr.bf16.mxu0 0
    %154 = vmatpush1.bf16.msra.mxu0 %v115
    %155 = vmatprep.subr.bf16.mxu0 0
    %156 = vmatpush1.bf16.msra.mxu0 %v116
    %157 = vmatprep.subr.bf16.mxu0 0
    %158 = vmatpush1.bf16.msra.mxu0 %v117
    %159 = vmatprep.subr.bf16.mxu0 0
    %160 = vmatpush1.bf16.msra.mxu0 %v118
    %161 = vmatprep.subr.bf16.mxu0 0
    %162 = vmatpush1.bf16.msra.mxu0 %v137
    %163 = vmatprep.subr.bf16.mxu0 0
    %164 = vmatpush1.bf16.msra.mxu0 0
    %165 = vmatprep.subr.bf16.mxu0 0
    %166 = vmatpush1.bf16.msra.mxu0 0
    %167 = vmatprep.subr.bf16.mxu0 0
    %168 = vmatpush1.bf16.msra.mxu0 0
    %169 = vmatprep.subr.bf16.mxu0 0
    %170 = vmatpush1.bf16.msra.mxu0 0
    %171 = vmatprep.mubr.bf16.mxu0 %v133
    %172 = vmatmul.mubr.bf16.gmra.mrb[0].mxu0 %v30
    %v173 = vpop.f32.mrb[0].mxu0
    %v174 = vadd.f32 %v60, %v173
    %v175 = vpop.f32.mrb[0].mxu0
    %v176 = vpop.f32.mrb[0].mxu0
    %v177 = vpop.f32.mrb[0].mxu0
    %178 = vdwg.mxu0
    %v179 = vmax.f32 %v174, 0.0
    %v180 = vpack.c.bf16 %v179, %v179
    %v181 = vld [vmem:[%s3] sm:$0xf]
    %v182 = vld [vmem:[%s3 + $0x4] sm:$0xf]
    %v183 = vld [vmem:[%s3 + $0x8] sm:$0xf]
    %v184 = vld [vmem:[%s3 + $0xc] sm:$0xf]
    %v185 = vld [vmem:[%s3 + $0x10] sm:$0xf]
    %v186 = vld [vmem:[%s3 + $0x14] sm:$0xf]
    %v187 = vld [vmem:[%s3 + $0x18] sm:$0xf]
    %v188 = vld [vmem:[%s3 + $0x1c] sm:$0xf]
    %v189 = vld [vmem:[%s3 + $0x20] sm:$0xf]
    %v190 = vld [vmem:[%s3 + $0x24] sm:$0xf]
    %v191 = vld [vmem:[%s3 + $0x28] sm:$0xf]
    %v192 = vld [vmem:[%s3 + $0x2c] sm:$0xf]
    %v193 = vld [vmem:[%s3 + $0x30] sm:$0xf]
    %v194 = vld [vmem:[%s3 + $0x34] sm:$0xf]
    %v195 = vld [vmem:[%s3 + $0x38] sm:$0xf]
    %v196 = vld [vmem:[%s3 + $0x3c] sm:$0xf]
    %v197 = vld [vmem:[%s4] sm:$0x1]
    %v199 = vlaneseq
    %v200 = vshrl.u32 %v199, 7
    %v201 = vsub.s32 0, %v200
    %v202 = vrot.slane %v197, %v201
    %v220 = vunpack.c.l.b16 %v181
    %v221 = vunpack.c.l.b16 %v182
    %v222 = vunpack.c.l.b16 %v183
    %v223 = vunpack.c.l.b16 %v184
    %v224 = vunpack.c.l.b16 %v185
    %v225 = vunpack.c.l.b16 %v186
    %v226 = vunpack.c.l.b16 %v187
    %v227 = vunpack.c.l.b16 %v188
    %v228 = vunpack.c.l.b16 %v189
    %v229 = vunpack.c.l.b16 %v190
    %v230 = vunpack.c.l.b16 %v191
    %v231 = vunpack.c.l.b16 %v192
    %v232 = vunpack.c.l.b16 %v193
    %v233 = vunpack.c.l.b16 %v194
    %v234 = vunpack.c.l.b16 %v195
    %v235 = vunpack.c.l.b16 %v196
    %v236 = vpack.c.b16 %v221, %v220
    %v237 = vpack.c.b16 %v223, %v222
    %v238 = vpack.c.b16 %v225, %v224
    %v239 = vpack.c.b16 %v227, %v226
    %v240 = vpack.c.b16 %v229, %v228
    %v241 = vpack.c.b16 %v231, %v230
    %v242 = vpack.c.b16 %v233, %v232
    %v243 = vpack.c.b16 %v235, %v234
    %252 = vmatprep.subr.bf16.mxu0 0
    %253 = vmatpush1.bf16.msra.mxu0 %v236
    %254 = vmatprep.subr.bf16.mxu0 0
    %255 = vmatpush1.bf16.msra.mxu0 %v237
    %256 = vmatprep.subr.bf16.mxu0 0
    %257 = vmatpush1.bf16.msra.mxu0 %v238
    %258 = vmatprep.subr.bf16.mxu0 0
    %259 = vmatpush1.bf16.msra.mxu0 %v239
    %260 = vmatprep.subr.bf16.mxu0 0
    %261 = vmatpush1.bf16.msra.mxu0 %v240
    %262 = vmatprep.subr.bf16.mxu0 0
    %263 = vmatpush1.bf16.msra.mxu0 %v241
    %264 = vmatprep.subr.bf16.mxu0 0
    %265 = vmatpush1.bf16.msra.mxu0 %v242
    %266 = vmatprep.subr.bf16.mxu0 0
    %267 = vmatpush1.bf16.msra.mxu0 %v243
    %268 = vmatprep.subr.bf16.mxu0 0
    %269 = vmatpush1.bf16.msra.mxu0 0
    %270 = vmatprep.subr.bf16.mxu0 0
    %271 = vmatpush1.bf16.msra.mxu0 0
    %272 = vmatprep.subr.bf16.mxu0 0
    %273 = vmatpush1.bf16.msra.mxu0 0
    %274 = vmatprep.subr.bf16.mxu0 0
    %275 = vmatpush1.bf16.msra.mxu0 0
    %276 = vmatprep.subr.bf16.mxu0 0
    %277 = vmatpush1.bf16.msra.mxu0 0
    %278 = vmatprep.subr.bf16.mxu0 0
    %279 = vmatpush1.bf16.msra.mxu0 0
    %280 = vmatprep.subr.bf16.mxu0 0
    %281 = vmatpush1.bf16.msra.mxu0 0
    %282 = vmatprep.subr.bf16.mxu0 0
    %283 = vmatpush1.bf16.msra.mxu0 0
    %284 = vmatprep.mubr.bf16.mxu0 0
    %285 = vmatmul.mubr.bf16.gmra.mrb[0].mxu0 %v180
    %v286 = vpop.f32.mrb[0].mxu0
    %v287 = vadd.f32 %v202, %v286
    %v288 = vpop.f32.mrb[0].mxu0
    %v289 = vpop.f32.mrb[0].mxu0
    %v290 = vpop.f32.mrb[0].mxu0
    %291 = vdwg.mxu0
    %v292 = vmax.f32 %v287, 0.0
    %v293 = vpack.c.bf16 %v292, %v292
    %v294 = vld [vmem:[%s5] sm:$0xff]
    %v295 = vld [vmem:[%s5 + $0x8] sm:$0xff]
    %v296 = vld [vmem:[%s5 + $0x10] sm:$0xff]
    %v297 = vld [vmem:[%s5 + $0x18] sm:$0xff]
    %v298 = vld [vmem:[%s5 + $0x20] sm:$0xff]
    %v299 = vld [vmem:[%s5 + $0x28] sm:$0xff]
    %v300 = vld [vmem:[%s5 + $0x30] sm:$0xff]
    %v301 = vld [vmem:[%s5 + $0x38] sm:$0xff]
    %v302 = vld [vmem:[%s5 + $0x40] sm:$0xff]
    %v303 = vld [vmem:[%s5 + $0x48] sm:$0xff]
    %v304 = vld [vmem:[%s5 + $0x50] sm:$0xff]
    %v305 = vld [vmem:[%s5 + $0x58] sm:$0xff]
    %v306 = vld [vmem:[%s5 + $0x60] sm:$0xff]
    %v307 = vld [vmem:[%s5 + $0x68] sm:$0xff]
    %v308 = vld [vmem:[%s5 + $0x70] sm:$0xff]
    %v309 = vld [vmem:[%s5 + $0x78] sm:$0xff]
    %v310 = vld [vmem:[%s6] sm:$0x3]
    %v312 = vlaneseq
    %v313 = vshrl.u32 %v312, 7
    %v314 = vsub.s32 0, %v313
    %v315 = vrot.slane %v310, %v314
    %v316 = vlaneseq
    %v317 = vshrl.u32 %v316, 7
    %v318 = vsub.s32 1, %v317
    %v319 = vrot.slane %v310, %v318
    %v338 = vunpack.c.l.b16 %v294
    %v339 = vunpack.c.h.b16 %v294
    %v340 = vunpack.c.l.b16 %v295
    %v341 = vunpack.c.h.b16 %v295
    %v342 = vunpack.c.l.b16 %v296
    %v343 = vunpack.c.h.b16 %v296
    %v344 = vunpack.c.l.b16 %v297
    %v345 = vunpack.c.h.b16 %v297
    %v346 = vunpack.c.l.b16 %v298
    %v347 = vunpack.c.h.b16 %v298
    %v348 = vunpack.c.l.b16 %v299
    %v349 = vunpack.c.h.b16 %v299
    %v350 = vunpack.c.l.b16 %v300
    %v351 = vunpack.c.h.b16 %v300
    %v352 = vunpack.c.l.b16 %v301
    %v353 = vunpack.c.h.b16 %v301
    %v354 = vunpack.c.l.b16 %v302
    %v355 = vunpack.c.h.b16 %v302
    %v356 = vunpack.c.l.b16 %v303
    %v357 = vunpack.c.h.b16 %v303
    %v358 = vunpack.c.l.b16 %v304
    %v359 = vunpack.c.h.b16 %v304
    %v360 = vunpack.c.l.b16 %v305
    %v361 = vunpack.c.h.b16 %v305
    %v362 = vunpack.c.l.b16 %v306
    %v363 = vunpack.c.h.b16 %v306
    %v364 = vunpack.c.l.b16 %v307
    %v365 = vunpack.c.h.b16 %v307
    %v366 = vunpack.c.l.b16 %v308
    %v367 = vunpack.c.h.b16 %v308
    %v368 = vunpack.c.l.b16 %v309
    %v369 = vunpack.c.h.b16 %v309
    %v370 = vpack.c.b16 %v340, %v338
    %v371 = vpack.c.b16 %v341, %v339
    %v372 = vpack.c.b16 %v344, %v342
    %v373 = vpack.c.b16 %v345, %v343
    %v374 = vpack.c.b16 %v348, %v346
    %v375 = vpack.c.b16 %v349, %v347
    %v376 = vpack.c.b16 %v352, %v350
    %v377 = vpack.c.b16 %v353, %v351
    %v378 = vpack.c.b16 %v356, %v354
    %v379 = vpack.c.b16 %v357, %v355
    %v380 = vpack.c.b16 %v360, %v358
    %v381 = vpack.c.b16 %v361, %v359
    %v382 = vpack.c.b16 %v364, %v362
    %v383 = vpack.c.b16 %v365, %v363
    %v384 = vpack.c.b16 %v368, %v366
    %v385 = vpack.c.b16 %v369, %v367
    %402 = vmatprep.subr.bf16.mxu0 %v371
    %403 = vmatpush1.bf16.msra.mxu0 %v370
    %404 = vmatprep.subr.bf16.mxu0 %v373
    %405 = vmatpush1.bf16.msra.mxu0 %v372
    %406 = vmatprep.subr.bf16.mxu0 %v375
    %407 = vmatpush1.bf16.msra.mxu0 %v374
    %408 = vmatprep.subr.bf16.mxu0 %v377
    %409 = vmatpush1.bf16.msra.mxu0 %v376
    %410 = vmatprep.subr.bf16.mxu0 %v379
    %411 = vmatpush1.bf16.msra.mxu0 %v378
    %412 = vmatprep.subr.bf16.mxu0 %v381
    %413 = vmatpush1.bf16.msra.mxu0 %v380
    %414 = vmatprep.subr.bf16.mxu0 %v383
    %415 = vmatpush1.bf16.msra.mxu0 %v382
    %416 = vmatprep.subr.bf16.mxu0 %v385
    %417 = vmatpush1.bf16.msra.mxu0 %v384
    %418 = vmatprep.subr.bf16.mxu0 0
    %419 = vmatpush1.bf16.msra.mxu0 0
    %420 = vmatprep.subr.bf16.mxu0 0
    %421 = vmatpush1.bf16.msra.mxu0 0
    %422 = vmatprep.subr.bf16.mxu0 0
    %423 = vmatpush1.bf16.msra.mxu0 0
    %424 = vmatprep.subr.bf16.mxu0 0
    %425 = vmatpush1.bf16.msra.mxu0 0
    %426 = vmatprep.subr.bf16.mxu0 0
    %427 = vmatpush1.bf16.msra.mxu0 0
    %428 = vmatprep.subr.bf16.mxu0 0
    %429 = vmatpush1.bf16.msra.mxu0 0
    %430 = vmatprep.subr.bf16.mxu0 0
    %431 = vmatpush1.bf16.msra.mxu0 0
    %432 = vmatprep.subr.bf16.mxu0 0
    %433 = vmatpush1.bf16.msra.mxu0 0
    %434 = vmatprep.mubr.bf16.mxu0 0
    %435 = vmatmul.mubr.bf16.gmra.mrb[0].mxu0 %v293
    %v436 = vpop.f32.mrb[0].mxu0
    %v437 = vadd.f32 %v315, %v436
    %v438 = vpop.f32.mrb[0].mxu0
    %v439 = vadd.f32 %v319, %v438
    %v440 = vpop.f32.mrb[0].mxu0
    %v441 = vpop.f32.mrb[0].mxu0
    %442 = vdwg.mxu0
    %443 = vst [vmem:[#allocation2] sm:$0xff] %v437
    %444 = vst.msk [vmem:[#allocation2 + $0x8] sm:$0xff] %vm131, %v439
    // Predicated region
    $region30: #{tpu_custom_call.1} parent=1 // pred_check
      _
    $region31: #{tpu_custom_call.1} parent=1 // pred_check_branch
      %446 = sbr.rel (0) target = $region33
    $region32: #{tpu_custom_call.1} parent=1 // pred_region
      %s448 = ssub.s32 256, 256
      %449 = vsyncadd [#allocation3], %s448
      %s451 = sshll.u32 [#allocation2], 4
      %s452 = int_to_ptr.vmem [resolvable:$true] %s451
      %454 = dma.vmem_to_hbm [thread:$0]  %s452, 256, %s7, [#allocation3]
    $region33: #{tpu_custom_call.1} parent=1 // pred_fallthru
      _
    // Predicated region
    $region34: #{tpu_custom_call.1} parent=1 // pred_check
      _
    $region35: #{tpu_custom_call.1} parent=1 // pred_check_branch
      %456 = sbr.rel (0) target = $region37
    $region36: #{tpu_custom_call.1} parent=1 // pred_region
      %457 = dma.done [#allocation3], 256
    $region37: #{tpu_custom_call.1} parent=1 // pred_fallthru
      _
    %458 = vsyncpa [#allocation3], 1

</llo_original>
